<compile_context>
chip_gen: v6e
topology: v6e:2x2x1
jax: 0.10.0
libtpu: 0.0.40
codegen_flags: <defaults>
</compile_context>

<pallas_src>
import functools
import math

import jax
import jax.numpy as jnp
from jax.experimental import pallas as pl
from jax.experimental.pallas import tpu as pltpu


def _round_up(x, m):
    return ((x + m - 1) // m) * m


# ----------------------------- Pallas kernel ------------------------------

def _ffn_kernel(x_ref, w1_ref, b1_ref, w2_ref, b2_ref, o_ref,
                xc_ref, acc_ref, *, compute_dtype):
    """One (tm, d_model) output tile; grid axis 1 chunks the d_ff reduction."""
    f = pl.program_id(1)

    @pl.when(f == 0)
    def _():
        acc_ref[...] = jnp.zeros_like(acc_ref)
        # Cast the resident x tile once per row tile (VPU filler under MXU).
        xc_ref[...] = x_ref[...].astype(compute_dtype)

    # hidden chunk: (tm, tf) = relu(x @ w1[:, chunk] + b1[chunk]), f32 accumulate.
    h = jnp.dot(xc_ref[...], w1_ref[...].astype(compute_dtype),
                preferred_element_type=jnp.float32)
    h = jnp.maximum(h + b1_ref[...], 0.0)

    # second matmul: accumulate the (tm, d_model) partial product in f32.
    acc_ref[...] += jnp.dot(h.astype(compute_dtype),
                            w2_ref[...].astype(compute_dtype),
                            preferred_element_type=jnp.float32)

    @pl.when(f == pl.num_programs(1) - 1)
    def _():
        o_ref[...] = (acc_ref[...] + b2_ref[...]).astype(o_ref.dtype)


# ------------------------------ wrapper ------------------------------------

def _tpu_budget():
    """Generation-aware tile caps and scoped-VMEM limit."""
    try:
        kind = jax.devices()[0].device_kind.lower()
    except Exception:
        kind = ""
    if "v7" in kind:                       # 64 MiB VMEM per TensorCore
        return dict(tm_cap=512, tf_cap=256, vmem_limit=48 * 1024 * 1024)
    if "v5 lite" in kind or "v5e" in kind or "v5litepod" in kind:
        return dict(tm_cap=384, tf_cap=256, vmem_limit=64 * 1024 * 1024)
    # v6e and other 128-MiB-VMEM parts.
    return dict(tm_cap=768, tf_cap=256, vmem_limit=100 * 1024 * 1024)


def positionwise_feed_forward(x, w1, b1, w2, b2, *,
                              tm=None, tf=None,
                              compute_dtype=jnp.bfloat16,
                              out_dtype=None):
    """x: (..., d_model); w1: (d_model, d_ff); w2: (d_ff, d_model).

    Pass w1/w2 already stored in `compute_dtype` (e.g. bf16) so the kernel
    streams 2-byte weights straight from HBM — weight traffic is the roofline.
    """
    orig_shape = x.shape
    d_model = orig_shape[-1]
    d_ff = w1.shape[1]
    out_dtype = x.dtype if out_dtype is None else out_dtype

    x2d = x.reshape(-1, d_model)
    M = x2d.shape[0]

    budget = _tpu_budget()
    if tm is None:
        tm = budget["tm_cap"]
    if tf is None:
        tf = budget["tf_cap"]

    tm = min(tm, _round_up(M, 8))
    # Keep >= 2 row tiles when possible so the "parallel" grid axis can shard
    # across both v7x TensorCores.
    if M >= 16 and _round_up(M, tm) // tm < 2:
        tm = max(8, ((M // 2) // 8) * 8)
    tf = min(tf, _round_up(d_ff, 128))

    # Zero-pad awkward shapes instead of silently blowing the VMEM budget.
    m_pad = _round_up(M, tm)
    f_pad = _round_up(d_ff, tf)
    if m_pad != M:
        x2d = jnp.pad(x2d, ((0, m_pad - M), (0, 0)))
    if f_pad != d_ff:
        w1 = jnp.pad(w1, ((0, 0), (0, f_pad - d_ff)))
        b1 = jnp.pad(b1, ((0, f_pad - d_ff),))
        w2 = jnp.pad(w2, ((0, f_pad - d_ff), (0, 0)))

    b1r = b1.reshape(1, f_pad).astype(jnp.float32)
    b2r = b2.reshape(1, d_model).astype(jnp.float32)

    grid = (m_pad // tm, f_pad // tf)

    flops = 4 * M * d_model * d_ff
    bytes_accessed = int(
        x2d.size * x2d.dtype.itemsize
        + w1.size * w1.dtype.itemsize
        + w2.size * w2.dtype.itemsize
        + b1r.size * 4 + b2r.size * 4
        + M * d_model * jnp.dtype(out_dtype).itemsize)

    kernel = functools.partial(_ffn_kernel, compute_dtype=compute_dtype)

    out = pl.pallas_call(
        kernel,
        out_shape=jax.ShapeDtypeStruct((m_pad, d_model), out_dtype),
        grid_spec=pltpu.PrefetchScalarGridSpec(
            num_scalar_prefetch=0,
            grid=grid,
            in_specs=[
                pl.BlockSpec((tm, d_model), lambda i, f: (i, 0)),  # x (resident over f)
                pl.BlockSpec((d_model, tf), lambda i, f: (0, f)),  # w1 chunk
                pl.BlockSpec((1, tf),       lambda i, f: (0, f)),  # b1 chunk
                pl.BlockSpec((tf, d_model), lambda i, f: (f, 0)),  # w2 chunk
                pl.BlockSpec((1, d_model),  lambda i, f: (0, 0)),  # b2
            ],
            out_specs=pl.BlockSpec((tm, d_model), lambda i, f: (i, 0)),
            scratch_shapes=[
                pltpu.VMEM((tm, d_model), compute_dtype),  # bf16 x tile
                pltpu.VMEM((tm, d_model), jnp.float32),    # f32 accumulator
            ],
        ),
        compiler_params=pltpu.CompilerParams(
            dimension_semantics=("parallel", "arbitrary"),
            vmem_limit_bytes=budget["vmem_limit"],
        ),
        cost_estimate=pl.CostEstimate(
            flops=flops, transcendentals=0, bytes_accessed=bytes_accessed),
    )(x2d, w1, b1r, w2, b2r)

    if m_pad != M:
        out = out[:M]
    return out.reshape(orig_shape[:-1] + (d_model,))


# --------------------------------- main -------------------------------------

if __name__ == "__main__":
    B, S, D_MODEL, D_FF = 2, 8, 128, 512

    root = jax.random.PRNGKey(0)
    kx, kw1, kb1, kw2, kb2 = jax.random.split(root, 5)

    x = jax.random.normal(kx, (B, S, D_MODEL), jnp.float32)
    w1 = jax.random.normal(kw1, (D_MODEL, D_FF), jnp.float32) / math.sqrt(D_MODEL)
    b1 = jax.random.normal(kb1, (D_FF,), jnp.float32) * 0.01
    w2 = jax.random.normal(kw2, (D_FF, D_MODEL), jnp.float32) / math.sqrt(D_FF)
    b2 = jax.random.normal(kb2, (D_MODEL,), jnp.float32) * 0.01

    # Store weights in the compute dtype ONCE, outside the per-call hot path,
    # so the kernel streams bf16 weights directly (no per-call cast pass).
    w1_bf = w1.astype(jnp.bfloat16)
    w2_bf = w2.astype(jnp.bfloat16)

    fwd = jax.jit(positionwise_feed_forward)
    out = fwd(x, w1_bf, b1, w2_bf, b2)
    jax.block_until_ready(out)

    # Pure-JAX f32 reference (dropout == identity in eval mode).
    ref = (jnp.maximum(x.reshape(-1, D_MODEL) @ w1 + b1, 0.0) @ w2 + b2)
    ref = ref.reshape(B, S, D_MODEL)

    assert out.shape == (B, S, D_MODEL)
    assert bool(jnp.all(jnp.isfinite(out)))
    # bf16 MXU operands with f32 accumulation: intentional ~1e-2-scale error.
    max_err = float(jnp.max(jnp.abs(out - ref)))
    assert max_err < 5e-2, f"max abs err {max_err}"
    print("KERNEL_OK")
</pallas_src>

<mosaic_0001>
module attributes {stable_mosaic.version = 11 : i64} {
  func.func @_ffn_kernel(%arg0: i32, %arg1: i32, %arg2: memref<8x128xf32, #tpu.memory_space<vmem>>, %arg3: memref<128x256xbf16, #tpu.memory_space<vmem>>, %arg4: memref<1x256xf32, #tpu.memory_space<vmem>>, %arg5: memref<256x128xbf16, #tpu.memory_space<vmem>>, %arg6: memref<1x128xf32, #tpu.memory_space<vmem>>, %arg7: memref<8x128xf32, #tpu.memory_space<vmem>>, %arg8: memref<8x128xbf16, #tpu.memory_space<vmem>>, %arg9: memref<8x128xf32, #tpu.memory_space<vmem>>) attributes {dimension_semantics = [#tpu.dimension_semantics<parallel>, #tpu.dimension_semantics<arbitrary>], iteration_bounds = array<i64: 2, 2>, scalar_prefetch = 0 : i64, scratch_operands = 2 : i64, tpu.core_type = #tpu.core_type<tc>, window_params = [{transform_indices = @transform_0, window_bounds = array<i64: 8, 128>}, {transform_indices = @transform_1, window_bounds = array<i64: 128, 256>}, {transform_indices = @transform_2, window_bounds = array<i64: 1, 256>}, {transform_indices = @transform_3, window_bounds = array<i64: 256, 128>}, {pipeline_mode = #tpu.pipeline_mode<synchronous>, transform_indices = @transform_4, window_bounds = array<i64: 1, 128>}, {transform_indices = @transform_5, window_bounds = array<i64: 8, 128>}]} {
    %c0_i32 = arith.constant 0 : i32
    %0 = arith.cmpi eq, %arg1, %c0_i32 : i32
    %1 = arith.extui %0 : i1 to i32
    %c0_i32_0 = arith.constant 0 : i32
    %2 = arith.cmpi ne, %1, %c0_i32_0 : i32
    scf.if %2 {
      %cst_15 = arith.constant 0.000000e+00 : f32
      %20 = vector.broadcast %cst_15 : f32 to vector<8x128xf32>
      %c0_16 = arith.constant 0 : index
      %c0_17 = arith.constant 0 : index
      %21 = vector.load %arg9[%c0_16, %c0_17] : memref<8x128xf32, #tpu.memory_space<vmem>>, vector<8x128xf32>
      tpu.vector_store %arg9[%c0_16, %c0_17], %20 {strides = array<i32>} : memref<8x128xf32, #tpu.memory_space<vmem>>, vector<8x128xf32>,
      %c0_18 = arith.constant 0 : index
      %c0_19 = arith.constant 0 : index
      %22 = vector.load %arg2[%c0_18, %c0_19] : memref<8x128xf32, #tpu.memory_space<vmem>>, vector<8x128xf32>
      %23 = arith.truncf %22 : vector<8x128xf32> to vector<8x128xbf16>
      %c0_20 = arith.constant 0 : index
      %c0_21 = arith.constant 0 : index
      %24 = vector.load %arg8[%c0_20, %c0_21] : memref<8x128xbf16, #tpu.memory_space<vmem>>, vector<8x128xbf16>
      tpu.vector_store %arg8[%c0_20, %c0_21], %23 {strides = array<i32>} : memref<8x128xbf16, #tpu.memory_space<vmem>>, vector<8x128xbf16>,
    } else {
    }
    %c0 = arith.constant 0 : index
    %c0_1 = arith.constant 0 : index
    %3 = vector.load %arg8[%c0, %c0_1] : memref<8x128xbf16, #tpu.memory_space<vmem>>, vector<8x128xbf16>
    %c0_2 = arith.constant 0 : index
    %c0_3 = arith.constant 0 : index
    %4 = vector.load %arg3[%c0_2, %c0_3] : memref<128x256xbf16, #tpu.memory_space<vmem>>, vector<128x256xbf16>
    %cst = arith.constant dense<0.000000e+00> : vector<8x256xf32>
    %5 = tpu.matmul %3, %4, %cst {dimension_numbers = #tpu.dot_dimension_numbers<[1], [0], [0], [1], [0, 0, 1, 1], [], []>} : vector<8x128xbf16>, vector<128x256xbf16>, vector<8x256xf32> -> vector<8x256xf32>
    %c0_4 = arith.constant 0 : index
    %c0_5 = arith.constant 0 : index
    %6 = vector.load %arg4[%c0_4, %c0_5] : memref<1x256xf32, #tpu.memory_space<vmem>>, vector<1x256xf32>
    %7 = vector.broadcast %6 : vector<1x256xf32> to vector<8x256xf32>
    %8 = arith.addf %5, %7 : vector<8x256xf32>
    %cst_6 = arith.constant 0.000000e+00 : f32
    %9 = vector.broadcast %cst_6 : f32 to vector<8x256xf32>
    %10 = arith.maximumf %8, %9 : vector<8x256xf32>
    %c0_7 = arith.constant 0 : index
    %c0_8 = arith.constant 0 : index
    %11 = vector.load %arg9[%c0_7, %c0_8] : memref<8x128xf32, #tpu.memory_space<vmem>>, vector<8x128xf32>
    %12 = arith.truncf %10 : vector<8x256xf32> to vector<8x256xbf16>
    %c0_9 = arith.constant 0 : index
    %c0_10 = arith.constant 0 : index
    %13 = vector.load %arg5[%c0_9, %c0_10] : memref<256x128xbf16, #tpu.memory_space<vmem>>, vector<256x128xbf16>
    %cst_11 = arith.constant dense<0.000000e+00> : vector<8x128xf32>
    %14 = tpu.matmul %12, %13, %cst_11 {dimension_numbers = #tpu.dot_dimension_numbers<[1], [0], [0], [1], [0, 0, 1, 1], [], []>} : vector<8x256xbf16>, vector<256x128xbf16>, vector<8x128xf32> -> vector<8x128xf32>
    %15 = arith.addf %11, %14 : vector<8x128xf32>
    %c0_12 = arith.constant 0 : index
    %c0_13 = arith.constant 0 : index
    %16 = vector.load %arg9[%c0_12, %c0_13] : memref<8x128xf32, #tpu.memory_space<vmem>>, vector<8x128xf32>
    tpu.vector_store %arg9[%c0_12, %c0_13], %15 {strides = array<i32>} : memref<8x128xf32, #tpu.memory_space<vmem>>, vector<8x128xf32>,
    %c1_i32 = arith.constant 1 : i32
    %17 = arith.cmpi eq, %arg1, %c1_i32 : i32
    %18 = arith.extui %17 : i1 to i32
    %c0_i32_14 = arith.constant 0 : i32
    %19 = arith.cmpi ne, %18, %c0_i32_14 : i32
    scf.if %19 {
      %c0_15 = arith.constant 0 : index
      %c0_16 = arith.constant 0 : index
      %20 = vector.load %arg9[%c0_15, %c0_16] : memref<8x128xf32, #tpu.memory_space<vmem>>, vector<8x128xf32>
      %c0_17 = arith.constant 0 : index
      %c0_18 = arith.constant 0 : index
      %21 = vector.load %arg6[%c0_17, %c0_18] : memref<1x128xf32, #tpu.memory_space<vmem>>, vector<1x128xf32>
      %22 = vector.broadcast %21 : vector<1x128xf32> to vector<8x128xf32>
      %23 = arith.addf %20, %22 : vector<8x128xf32>
      %c0_19 = arith.constant 0 : index
      %c0_20 = arith.constant 0 : index
      %24 = vector.load %arg7[%c0_19, %c0_20] : memref<8x128xf32, #tpu.memory_space<vmem>>, vector<8x128xf32>
      tpu.vector_store %arg7[%c0_19, %c0_20], %23 {strides = array<i32>} : memref<8x128xf32, #tpu.memory_space<vmem>>, vector<8x128xf32>,
    } else {
    }
    return
  }
  func.func @transform_0(%arg0: i32, %arg1: i32) -> (i32, i32) {
    %c0_i32 = arith.constant 0 : i32
    %c0_i32_0 = arith.constant 0 : i32
    return %arg0, %c0_i32 : i32, i32
  }
  func.func @transform_1(%arg0: i32, %arg1: i32) -> (i32, i32) {
    %c0_i32 = arith.constant 0 : i32
    %c0_i32_0 = arith.constant 0 : i32
    return %c0_i32, %arg1 : i32, i32
  }
  func.func @transform_2(%arg0: i32, %arg1: i32) -> (i32, i32) {
    %c0_i32 = arith.constant 0 : i32
    %c0_i32_0 = arith.constant 0 : i32
    return %c0_i32, %arg1 : i32, i32
  }
  func.func @transform_3(%arg0: i32, %arg1: i32) -> (i32, i32) {
    %c0_i32 = arith.constant 0 : i32
    %c0_i32_0 = arith.constant 0 : i32
    return %arg1, %c0_i32 : i32, i32
  }
  func.func @transform_4(%arg0: i32, %arg1: i32) -> (i32, i32) {
    %c0_i32 = arith.constant 0 : i32
    %c0_i32_0 = arith.constant 0 : i32
    %c0_i32_1 = arith.constant 0 : i32
    return %c0_i32, %c0_i32_0 : i32, i32
  }
  func.func @transform_5(%arg0: i32, %arg1: i32) -> (i32, i32) {
    %c0_i32 = arith.constant 0 : i32
    %c0_i32_0 = arith.constant 0 : i32
    return %arg0, %c0_i32 : i32, i32
  }
}

</mosaic_0001>

<llo_original>
// kernel: positionwise_feed_forward.1
$region0: #{positionwise_feed_forward.1}
  #allocation0 [shape = 'u32[]', space=smem, size = 0x4, offset = 0x4, fixed_abs, tag = 'smem constant byte address 0x4 - core index']
  #allocation1 [shape = 'u32[144,128]{1,0:T(1,128)}', space=vmem, size = 0x12000, scoped, tag = 'internal scratch']
  #allocation2 [shape = 'bf16[8,128]{1,0:T(8,128)(2,1)}', space=vmem, size = 0x800, scoped, tag = 'scratch operand']
  #allocation3 [shape = 'f32[8,128]{1,0:T(8,128)}', space=vmem, size = 0x1000, scoped, tag = 'scratch operand']
  %s0 = inlined_call_operand.hbm [shape: f32[16,128], index: 0, kind: input, shape index: {}]
  %s1 = inlined_call_operand.hbm [shape: bf16[128,512], index: 1, kind: input, shape index: {}]
  %s2 = inlined_call_operand.vmem [shape: f32[1,512], index: 2, kind: input, shape index: {}]
  %s3 = inlined_call_operand.hbm [shape: bf16[512,128], index: 3, kind: input, shape index: {}]
  %s4 = inlined_call_operand.vmem [shape: f32[1,128], index: 4, kind: input, shape index: {}]
  %s5 = inlined_call_operand.hbm [shape: f32[16,128], index: 5, kind: output, shape index: {}]
  %s6 = sld [smem:[#allocation0]]
  $region73: #{positionwise_feed_forward.1} parent=0
    _
  %s8 = ssub.s32 1, %s6
  %s9 = scalar_select 0, %s8, %s6
  $region1: #{positionwise_feed_forward.1} parent=0
    #allocation4 [shape = 'u8[8192]{0}', space=vmem, size = 0x2000, scoped, tag = 'input window, operand 0']
    #allocation5 [shape = 's32[2]{0}', space=sflag, size = 0x8, scoped, tag = 'scoped memory for positionwise_feed_forward.1']
    #allocation6 [shape = 's32[2]{0}', space=sflag, size = 0x8, scoped, tag = 'scoped memory for positionwise_feed_forward.1']
    #allocation7 [shape = 'u8[131072]{0}', space=vmem, size = 0x20000, scoped, tag = 'input window, operand 1']
    #allocation8 [shape = 's32[2]{0}', space=sflag, size = 0x8, scoped, tag = 'scoped memory for positionwise_feed_forward.1']
    #allocation9 [shape = 'u8[131072]{0}', space=vmem, size = 0x20000, scoped, tag = 'input window, operand 3']
    #allocation10 [shape = 'u8[8192]{0}', space=vmem, size = 0x2000, scoped, tag = 'output window, operand 0']
    %10 = vsyncpa [#allocation5], 0
    %s11 = scalar_lea.sflag [#allocation5], 1
    %12 = vsyncpa %s11, 0
    %13 = vsyncpa [#allocation8], 0
    %s14 = scalar_lea.sflag [#allocation8], 1
    %15 = vsyncpa %s14, 0
    %16 = vsyncpa [#allocation6], 0
    %s17 = scalar_lea.sflag [#allocation6], 1
    %18 = vsyncpa %s17, 0
    loop: start=0, step=1, limit=6
    $region2: #{positionwise_feed_forward.1} parent=1 // loop_pre_header
      _
    $region3: #{positionwise_feed_forward.1} parent=1 // loop_header
      %s20 = sphi 0, %s24
      %p21 = scmp.ge.s32.totalorder %s20, 6
      %s27 = sphi 0, %s39
      %s28 = sphi 0, %s35
      %s29 = sphi 0, %s27
      %s30 = sphi 0, %s28
      %s31 = sphi 0, %s29
      %s32 = sphi 0, %s30
      %s42 = sphi 0, %s44
      %s45 = sphi 0, %s42
      %s46 = sphi 0, %s45
      %s62 = sphi 0, %s46
      %s68 = sphi 0, %s70
      %s71 = sphi 0, %s68
      %s72 = sphi 0, %s71
      %s88 = sphi 0, %s72
      %s94 = sphi 0, %s96
      %s97 = sphi 0, %s94
      %s98 = sphi 0, %s97
      %s114 = sphi 0, %s98
      %s120 = sphi 0, %s122
      %s123 = sphi 0, %s120
      %s124 = sphi 0, %s123
      %s140 = sphi 0, %s124
      %s144 = sphi 0, %s144
      %s146 = sphi 0, %s144
      %s147 = sphi 0, %s146
      %s161 = sphi 0, %s147
      %s167 = sphi 0, %s169
      %s170 = sphi 0, %s167
      %s171 = sphi 0, %s170
      %s187 = sphi 0, %s171
    $region4: #{positionwise_feed_forward.1} parent=1 // loop_header_branch
      %23 = sbr.rel (%p21) target = $region8
    $region5: #{positionwise_feed_forward.1} parent=1 // loop_body
      %s25 = ssub.s32 %s20, 1
      %s26 = ssub.s32 %s20, 2
      %s33 = sadd.s32 1, %s28
      %p34 = scmp.ge.s32.totalorder %s33, 2
      %s35 = scalar_select %p34, 0, %s33
      %s36 = sadd.s32 1, %s27
      %s37 = scalar_select %p34, %s36, %s27
      %p38 = scmp.ge.s32.totalorder %s37, 2
      %s39 = scalar_select %p38, 0, %s37
      %s40 = ssub.s32 %s27, %s39
      %p41 = scmp.eq.s32.totalorder %s40, 0
      %s43 = sadd.s32 %s42, 1
      %s44 = scalar_select %p41, %s42, %s43
      %p47 = pneg %p41
      %p48 = scmp.eq.s32.totalorder %s20, 3
      %p49 = por %p47, %p48
      %p50 = scmp.ne.s32.totalorder %s42, %s45
      %p51 = scmp.eq.s32.totalorder %s20, 0
      %p52 = por %p50, %p51
      %p53 = scmp.ne.s32.totalorder %s42, %s45
      %p54 = scmp.eq.s32.totalorder %s25, 3
      %p55 = por %p53, %p54
      %p56 = scmp.ne.s32.totalorder %s45, %s46
      %p57 = scmp.eq.s32.totalorder %s25, 0
      %p58 = por %p56, %p57
      %p59 = scmp.ne.s32.totalorder %s45, %s46
      %p60 = scmp.eq.s32.totalorder %s26, 3
      %p61 = por %p59, %p60
      %p63 = scmp.ne.s32.totalorder %s46, %s62
      %p64 = scmp.eq.s32.totalorder %s26, 0
      %p65 = por %p63, %p64
      %s66 = ssub.s32 %s28, %s35
      %p67 = scmp.eq.s32.totalorder %s66, 0
      %s69 = sadd.s32 %s68, 1
      %s70 = scalar_select %p67, %s68, %s69
      %p73 = pneg %p67
      %p74 = scmp.eq.s32.totalorder %s20, 3
      %p75 = por %p73, %p74
      %p76 = scmp.ne.s32.totalorder %s68, %s71
      %p77 = scmp.eq.s32.totalorder %s20, 0
      %p78 = por %p76, %p77
      %p79 = scmp.ne.s32.totalorder %s68, %s71
      %p80 = scmp.eq.s32.totalorder %s25, 3
      %p81 = por %p79, %p80
      %p82 = scmp.ne.s32.totalorder %s71, %s72
      %p83 = scmp.eq.s32.totalorder %s25, 0
      %p84 = por %p82, %p83
      %p85 = scmp.ne.s32.totalorder %s71, %s72
      %p86 = scmp.eq.s32.totalorder %s26, 3
      %p87 = por %p85, %p86
      %p89 = scmp.ne.s32.totalorder %s72, %s88
      %p90 = scmp.eq.s32.totalorder %s26, 0
      %p91 = por %p89, %p90
      %s92 = ssub.s32 %s28, %s35
      %p93 = scmp.eq.s32.totalorder %s92, 0
      %s95 = sadd.s32 %s94, 1
      %s96 = scalar_select %p93, %s94, %s95
      %p99 = pneg %p93
      %p100 = scmp.eq.s32.totalorder %s20, 3
      %p101 = por %p99, %p100
      %p102 = scmp.ne.s32.totalorder %s94, %s97
      %p103 = scmp.eq.s32.totalorder %s20, 0
      %p104 = por %p102, %p103
      %p105 = scmp.ne.s32.totalorder %s94, %s97
      %p106 = scmp.eq.s32.totalorder %s25, 3
      %p107 = por %p105, %p106
      %p108 = scmp.ne.s32.totalorder %s97, %s98
      %p109 = scmp.eq.s32.totalorder %s25, 0
      %p110 = por %p108, %p109
      %p111 = scmp.ne.s32.totalorder %s97, %s98
      %p112 = scmp.eq.s32.totalorder %s26, 3
      %p113 = por %p111, %p112
      %p115 = scmp.ne.s32.totalorder %s98, %s114
      %p116 = scmp.eq.s32.totalorder %s26, 0
      %p117 = por %p115, %p116
      %s118 = ssub.s32 %s28, %s35
      %p119 = scmp.eq.s32.totalorder %s118, 0
      %s121 = sadd.s32 %s120, 1
      %s122 = scalar_select %p119, %s120, %s121
      %p125 = pneg %p119
      %p126 = scmp.eq.s32.totalorder %s20, 3
      %p127 = por %p125, %p126
      %p128 = scmp.ne.s32.totalorder %s120, %s123
      %p129 = scmp.eq.s32.totalorder %s20, 0
      %p130 = por %p128, %p129
      %p131 = scmp.ne.s32.totalorder %s120, %s123
      %p132 = scmp.eq.s32.totalorder %s25, 3
      %p133 = por %p131, %p132
      %p134 = scmp.ne.s32.totalorder %s123, %s124
      %p135 = scmp.eq.s32.totalorder %s25, 0
      %p136 = por %p134, %p135
      %p137 = scmp.ne.s32.totalorder %s123, %s124
      %p138 = scmp.eq.s32.totalorder %s26, 3
      %p139 = por %p137, %p138
      %p141 = scmp.ne.s32.totalorder %s124, %s140
      %p142 = scmp.eq.s32.totalorder %s26, 0
      %p143 = por %p141, %p142
      %s145 = sadd.s32 %s144, 1
      %p148 = scmp.eq.s32.totalorder %s20, 3
      %p149 = scmp.ne.s32.totalorder %s144, %s146
      %p150 = scmp.eq.s32.totalorder %s20, 0
      %p151 = por %p149, %p150
      %p152 = scmp.ne.s32.totalorder %s144, %s146
      %p153 = scmp.eq.s32.totalorder %s25, 3
      %p154 = por %p152, %p153
      %p155 = scmp.ne.s32.totalorder %s146, %s147
      %p156 = scmp.eq.s32.totalorder %s25, 0
      %p157 = por %p155, %p156
      %p158 = scmp.ne.s32.totalorder %s146, %s147
      %p159 = scmp.eq.s32.totalorder %s26, 3
      %p160 = por %p158, %p159
      %p162 = scmp.ne.s32.totalorder %s147, %s161
      %p163 = scmp.eq.s32.totalorder %s26, 0
      %p164 = por %p162, %p163
      %s165 = ssub.s32 %s27, %s39
      %p166 = scmp.eq.s32.totalorder %s165, 0
      %s168 = sadd.s32 %s167, 1
      %s169 = scalar_select %p166, %s167, %s168
      %p172 = pneg %p166
      %p173 = scmp.eq.s32.totalorder %s20, 3
      %p174 = por %p172, %p173
      %p175 = scmp.ne.s32.totalorder %s167, %s170
      %p176 = scmp.eq.s32.totalorder %s20, 0
      %p177 = por %p175, %p176
      %p178 = scmp.ne.s32.totalorder %s167, %s170
      %p179 = scmp.eq.s32.totalorder %s25, 3
      %p180 = por %p178, %p179
      %p181 = scmp.ne.s32.totalorder %s170, %s171
      %p182 = scmp.eq.s32.totalorder %s25, 0
      %p183 = por %p181, %p182
      %p184 = scmp.ne.s32.totalorder %s170, %s171
      %p185 = scmp.eq.s32.totalorder %s26, 3
      %p186 = por %p184, %p185
      %p188 = scmp.ne.s32.totalorder %s171, %s187
      %p189 = scmp.eq.s32.totalorder %s26, 0
      %p190 = por %p188, %p189
      %p191 = scmp.le.s32.totalorder 1, %s20
      %p192 = scmp.lt.s32.totalorder %s20, 5
      %p193 = pnand %p191, %p192
      %p194 = pneg %p193
      // Predicated region
      $region9: #{positionwise_feed_forward.1} parent=5 // pred_check
        _
      $region10: #{positionwise_feed_forward.1} parent=5 // pred_check_branch
        %196 = sbr.rel (%p193) target = $region12
      $region11: #{positionwise_feed_forward.1} parent=5 // pred_region
        %s197 = ssub.s32 %s20, 1
        // Predicated region
        $region13: #{positionwise_feed_forward.1} parent=11 // pred_check
          %p198 = pneg %p157
        $region14: #{positionwise_feed_forward.1} parent=11 // pred_check_branch
          %200 = sbr.rel (%p198) target = $region16
        $region15: #{positionwise_feed_forward.1} parent=11 // pred_region
          _
        $region16: #{positionwise_feed_forward.1} parent=11 // pred_fallthru
          _
      $region12: #{positionwise_feed_forward.1} parent=5 // pred_fallthru
        _
      %p201 = scmp.lt.s32.totalorder %s20, 4
      // Predicated region
      $region17: #{positionwise_feed_forward.1} parent=5 // pred_check
        %p202 = pneg %p201
      $region18: #{positionwise_feed_forward.1} parent=5 // pred_check_branch
        %204 = sbr.rel (%p202) target = $region20
      $region19: #{positionwise_feed_forward.1} parent=5 // pred_region
        // Predicated region
        $region21: #{positionwise_feed_forward.1} parent=19 // pred_check
          %p205 = pneg %p52
        $region22: #{positionwise_feed_forward.1} parent=19 // pred_check_branch
          %207 = sbr.rel (%p205) target = $region24
        $region23: #{positionwise_feed_forward.1} parent=19 // pred_region
          %s208 = sand.u32 %s42, 1
          %s209 = scalar_lea.sflag [#allocation5], %s208
          %s210 = sand.u32 %s42, 1
          %s211 = smul.addr %s210, 8
          %s212 = scalar_lea.vmem [#allocation4], %s211
          %s214 = ssub.s32 128, 128
          %215 = vsyncadd %s209, %s214
          %s216 = smul.addr %s27, 128
          %s217 = scalar_lea.hbm %s0, %s216
          %s219 = sshll.u32 %s212, 4
          %s220 = int_to_ptr.vmem [resolvable:$true] %s219
          %222 = dma.hbm_to_vmem [thread:$0]  %s217, 128, %s220, %s209
        $region24: #{positionwise_feed_forward.1} parent=19 // pred_fallthru
          _
        // Predicated region
        $region25: #{positionwise_feed_forward.1} parent=19 // pred_check
          %p223 = pneg %p78
        $region26: #{positionwise_feed_forward.1} parent=19 // pred_check_branch
          %225 = sbr.rel (%p223) target = $region28
        $region27: #{positionwise_feed_forward.1} parent=19 // pred_region
          %s226 = sand.u32 %s20, 1
          %s227 = scalar_lea.sflag [#allocation8], %s226
          %s228 = sand.u32 %s68, 1
          %s229 = smul.addr %s228, 128
          %s230 = scalar_lea.vmem [#allocation7], %s229
          %s231 = smul.u32 2, %s28
          %s233 = ssub.s32 2048, 2048
          %234 = vsyncadd %s227, %s233
          %s235 = smul.addr %s231, 64
          %s236 = scalar_lea.hbm %s1, %s235
          %s237 = sshll.u32 %s230, 4
          %s238 = int_to_ptr.vmem [resolvable:$true] %s237
          %243 = dma.hbm_to_vmem [thread:$0]  %s236, 2048, %s238, %s227, 256, 128, 8
        $region28: #{positionwise_feed_forward.1} parent=19 // pred_fallthru
          _
        // Predicated region
        $region29: #{positionwise_feed_forward.1} parent=19 // pred_check
          %p244 = pneg %p104
        $region30: #{positionwise_feed_forward.1} parent=19 // pred_check_branch
          %246 = sbr.rel (%p244) target = $region32
        $region31: #{positionwise_feed_forward.1} parent=19 // pred_region
          %s247 = smul.u32 2, %s28
          %p248 = scmp.lt.s32.totalorder %s247, 3
          %s249 = scalar_select %p248, %s247, 3
          %s250 = scalar_lea.vmem %s2, %s249
          %s251 = smul.u32 2, %s28
        $region32: #{positionwise_feed_forward.1} parent=19 // pred_fallthru
          _
        // Predicated region
        $region33: #{positionwise_feed_forward.1} parent=19 // pred_check
          %p252 = pneg %p130
        $region34: #{positionwise_feed_forward.1} parent=19 // pred_check_branch
          %254 = sbr.rel (%p252) target = $region36
        $region35: #{positionwise_feed_forward.1} parent=19 // pred_region
          %s255 = sand.u32 %s20, 1
          %s256 = scalar_lea.sflag [#allocation8], %s255
          %s257 = sand.u32 %s120, 1
          %s258 = smul.addr %s257, 128
          %s259 = scalar_lea.vmem [#allocation9], %s258
          %s260 = smul.u32 32, %s28
          %s262 = ssub.s32 2048, 2048
          %263 = vsyncadd %s256, %s262
          %s264 = smul.addr %s260, 64
          %s265 = scalar_lea.hbm %s3, %s264
          %s266 = sshll.u32 %s259, 4
          %s267 = int_to_ptr.vmem [resolvable:$true] %s266
          %272 = dma.hbm_to_vmem [thread:$0]  %s265, 2048, %s267, %s256, 64, 64, 4
        $region36: #{positionwise_feed_forward.1} parent=19 // pred_fallthru
          _
      $region20: #{positionwise_feed_forward.1} parent=5 // pred_fallthru
        _
      %p273 = scmp.le.s32.totalorder 1, %s20
      %p274 = scmp.lt.s32.totalorder %s20, 5
      %p275 = pnand %p273, %p274
      %p276 = pneg %p275
      // Predicated region
      $region37: #{positionwise_feed_forward.1} parent=5 // pred_check
        _
      $region38: #{positionwise_feed_forward.1} parent=5 // pred_check_branch
        %278 = sbr.rel (%p275) target = $region40
      $region39: #{positionwise_feed_forward.1} parent=5 // pred_region
        %s279 = ssub.s32 %s20, 1
        %s280 = sand.u32 %s45, 1
        %s281 = scalar_lea.sflag [#allocation5], %s280
        %s282 = sand.u32 %s45, 1
        %s283 = smul.addr %s282, 8
        %s284 = scalar_lea.vmem [#allocation4], %s283
        // Predicated region
        $region41: #{positionwise_feed_forward.1} parent=39 // pred_check
          %p285 = pneg %p58
        $region42: #{positionwise_feed_forward.1} parent=39 // pred_check_branch
          %287 = sbr.rel (%p285) target = $region44
        $region43: #{positionwise_feed_forward.1} parent=39 // pred_region
          %288 = dma.done %s281, 128
        $region44: #{positionwise_feed_forward.1} parent=39 // pred_fallthru
          _
        %s289 = sand.u32 %s25, 1
        %s290 = scalar_lea.sflag [#allocation8], %s289
        %s291 = sand.u32 %s71, 1
        %s292 = smul.addr %s291, 128
        %s293 = scalar_lea.vmem [#allocation7], %s292
        // Predicated region
        $region45: #{positionwise_feed_forward.1} parent=39 // pred_check
          %p294 = pneg %p84
        $region46: #{positionwise_feed_forward.1} parent=39 // pred_check_branch
          %296 = sbr.rel (%p294) target = $region48
        $region47: #{positionwise_feed_forward.1} parent=39 // pred_region
          %297 = dma.done %s290, 2048
        $region48: #{positionwise_feed_forward.1} parent=39 // pred_fallthru
          _
        %s298 = sand.u32 %s25, 1
        %s299 = scalar_lea.sflag [#allocation8], %s298
        %s300 = sand.u32 %s123, 1
        %s301 = smul.addr %s300, 128
        %s302 = scalar_lea.vmem [#allocation9], %s301
        // Predicated region
        $region49: #{positionwise_feed_forward.1} parent=39 // pred_check
          %p303 = pneg %p136
        $region50: #{positionwise_feed_forward.1} parent=39 // pred_check_branch
          %305 = sbr.rel (%p303) target = $region52
        $region51: #{positionwise_feed_forward.1} parent=39 // pred_region
          %306 = dma.done %s299, 2048
        $region52: #{positionwise_feed_forward.1} parent=39 // pred_fallthru
          _
        %s307 = sand.u32 %s45, 1
        %s308 = scalar_lea.sflag [#allocation5], %s307
        %s309 = sand.u32 %s45, 1
        %s310 = smul.addr %s309, 8
        %s311 = scalar_lea.vmem [#allocation4], %s310
        %p312 = pneg %p58
        %p313 = pneg %p55
        %s314 = sand.u32 %s25, 1
        %s315 = scalar_lea.sflag [#allocation8], %s314
        %s316 = sand.u32 %s71, 1
        %s317 = smul.addr %s316, 128
        %s318 = scalar_lea.vmem [#allocation7], %s317
        %p319 = pneg %p84
        %p320 = pneg %p81
        %s321 = smul.u32 2, %s30
        %p322 = scmp.lt.s32.totalorder %s321, 3
        %s323 = scalar_select %p322, %s321, 3
        %s324 = scalar_lea.vmem %s2, %s323
        %p325 = pneg %p110
        %p326 = pneg %p107
        %s327 = sand.u32 %s25, 1
        %s328 = scalar_lea.sflag [#allocation8], %s327
        %s329 = sand.u32 %s123, 1
        %s330 = smul.addr %s329, 128
        %s331 = scalar_lea.vmem [#allocation9], %s330
        %p332 = pneg %p136
        %p333 = pneg %p133
        %p334 = pneg %p157
        %p335 = pneg %p154
        %p336 = pneg %p183
        %p337 = pneg %p180
        %s338 = sand.u32 %s170, 1
        %s339 = scalar_lea.sflag [#allocation6], %s338
        %s340 = sand.u32 %s170, 1
        %s341 = smul.addr %s340, 8
        %s342 = scalar_lea.vmem [#allocation10], %s341
        %s343 = smul.u32 2, %s30
        %s344 = smul.u32 2, %s30
        %p345 = scmp.lt.s32.totalorder %s344, 3
        %s346 = scalar_select %p345, %s344, 3
        %s347 = scalar_lea.vmem %s2, %s346
        %s348 = smul.u32 2, %s30
        %s349 = smul.u32 32, %s30
        %p351 = scmp.eq.s32.totalorder %s30, 0
        // Predicated region
        $region53: #{positionwise_feed_forward.1} parent=39 // pred_check
          %p352 = pneg %p351
        $region54: #{positionwise_feed_forward.1} parent=39 // pred_check_branch
          %354 = sbr.rel (%p352) target = $region56
        $region55: #{positionwise_feed_forward.1} parent=39 // pred_region
          %355 = vst [vmem:[#allocation3] sm:$0xff] 0.0
          %v356 = vld [vmem:[%s284] sm:$0xff]
          %v357 = vpack.c.bf16 %v356, %v356
          %358 = vst [vmem:[#allocation2] sm:$0xf] %v357
        $region56: #{positionwise_feed_forward.1} parent=39 // pred_fallthru
          _
        %v359 = vld [vmem:[#allocation2] sm:$0xf]
        %v360 = vld [vmem:[%s293] sm:$0xff]
        %v361 = vld [vmem:[%s293 + $0x8] sm:$0xff]
        %v362 = vld [vmem:[%s293 + $0x10] sm:$0xff]
        %v363 = vld [vmem:[%s293 + $0x18] sm:$0xff]
        %v364 = vld [vmem:[%s293 + $0x20] sm:$0xff]
        %v365 = vld [vmem:[%s293 + $0x28] sm:$0xff]
        %v366 = vld [vmem:[%s293 + $0x30] sm:$0xff]
        %v367 = vld [vmem:[%s293 + $0x38] sm:$0xff]
        %v368 = vld [vmem:[%s293 + $0x40] sm:$0xff]
        %v369 = vld [vmem:[%s293 + $0x48] sm:$0xff]
        %v370 = vld [vmem:[%s293 + $0x50] sm:$0xff]
        %v371 = vld [vmem:[%s293 + $0x58] sm:$0xff]
        %v372 = vld [vmem:[%s293 + $0x60] sm:$0xff]
        %v373 = vld [vmem:[%s293 + $0x68] sm:$0xff]
        %v374 = vld [vmem:[%s293 + $0x70] sm:$0xff]
        %v375 = vld [vmem:[%s293 + $0x78] sm:$0xff]
        %v376 = vld [vmem:[%s347] sm:$0x3]
        %v378 = vlaneseq
        %v379 = vshrl.u32 %v378, 7
        %v380 = vsub.s32 0, %v379
        %v381 = vrot.slane %v376, %v380
        %v382 = vlaneseq
        %v383 = vshrl.u32 %v382, 7
        %v384 = vsub.s32 1, %v383
        %v385 = vrot.slane %v376, %v384
        %v404 = vunpack.c.l.b16 %v360
        %v405 = vunpack.c.h.b16 %v360
        %v406 = vunpack.c.l.b16 %v361
        %v407 = vunpack.c.h.b16 %v361
        %v408 = vunpack.c.l.b16 %v362
        %v409 = vunpack.c.h.b16 %v362
        %v410 = vunpack.c.l.b16 %v363
        %v411 = vunpack.c.h.b16 %v363
        %v412 = vunpack.c.l.b16 %v364
        %v413 = vunpack.c.h.b16 %v364
        %v414 = vunpack.c.l.b16 %v365
        %v415 = vunpack.c.h.b16 %v365
        %v416 = vunpack.c.l.b16 %v366
        %v417 = vunpack.c.h.b16 %v366
        %v418 = vunpack.c.l.b16 %v367
        %v419 = vunpack.c.h.b16 %v367
        %v420 = vunpack.c.l.b16 %v368
        %v421 = vunpack.c.h.b16 %v368
        %v422 = vunpack.c.l.b16 %v369
        %v423 = vunpack.c.h.b16 %v369
        %v424 = vunpack.c.l.b16 %v370
        %v425 = vunpack.c.h.b16 %v370
        %v426 = vunpack.c.l.b16 %v371
        %v427 = vunpack.c.h.b16 %v371
        %v428 = vunpack.c.l.b16 %v372
        %v429 = vunpack.c.h.b16 %v372
        %v430 = vunpack.c.l.b16 %v373
        %v431 = vunpack.c.h.b16 %v373
        %v432 = vunpack.c.l.b16 %v374
        %v433 = vunpack.c.h.b16 %v374
        %v434 = vunpack.c.l.b16 %v375
        %v435 = vunpack.c.h.b16 %v375
        %v436 = vpack.c.b16 %v406, %v404
        %v437 = vpack.c.b16 %v407, %v405
        %v438 = vpack.c.b16 %v410, %v408
        %v439 = vpack.c.b16 %v411, %v409
        %v440 = vpack.c.b16 %v414, %v412
        %v441 = vpack.c.b16 %v415, %v413
        %v442 = vpack.c.b16 %v418, %v416
        %v443 = vpack.c.b16 %v419, %v417
        %v444 = vpack.c.b16 %v422, %v420
        %v445 = vpack.c.b16 %v423, %v421
        %v446 = vpack.c.b16 %v426, %v424
        %v447 = vpack.c.b16 %v427, %v425
        %v448 = vpack.c.b16 %v430, %v428
        %v449 = vpack.c.b16 %v431, %v429
        %v450 = vpack.c.b16 %v434, %v432
        %v451 = vpack.c.b16 %v435, %v433
        %468 = vmatprep.subr.bf16.mxu0 %v451
        %469 = vmatpush1.bf16.msra.mxu0 %v450
        %470 = vmatprep.subr.bf16.mxu0 %v449
        %471 = vmatpush1.bf16.msra.mxu0 %v448
        %472 = vmatprep.subr.bf16.mxu0 %v447
        %473 = vmatpush1.bf16.msra.mxu0 %v446
        %474 = vmatprep.subr.bf16.mxu0 %v445
        %475 = vmatpush1.bf16.msra.mxu0 %v444
        %476 = vmatprep.subr.bf16.mxu0 %v443
        %477 = vmatpush1.bf16.msra.mxu0 %v442
        %478 = vmatprep.subr.bf16.mxu0 %v441
        %479 = vmatpush1.bf16.msra.mxu0 %v440
        %480 = vmatprep.subr.bf16.mxu0 %v439
        %481 = vmatpush1.bf16.msra.mxu0 %v438
        %482 = vmatprep.subr.bf16.mxu0 %v437
        %483 = vmatpush1.bf16.msra.mxu0 %v436
        %484 = vmatprep.subr.bf16.mxu0 0
        %485 = vmatpush2.bf16.msra.mxu0 0
        %486 = vmatprep.subr.bf16.mxu0 0
        %487 = vmatpush2.bf16.msra.mxu0 0
        %488 = vmatprep.subr.bf16.mxu0 0
        %489 = vmatpush2.bf16.msra.mxu0 0
        %490 = vmatprep.subr.bf16.mxu0 0
        %491 = vmatpush2.bf16.msra.mxu0 0
        %492 = vmatprep.subr.bf16.mxu0 0
        %493 = vmatpush2.bf16.msra.mxu0 0
        %494 = vmatprep.subr.bf16.mxu0 0
        %495 = vmatpush2.bf16.msra.mxu0 0
        %496 = vmatprep.subr.bf16.mxu0 0
        %497 = vmatpush2.bf16.msra.mxu0 0
        %498 = vmatprep.subr.bf16.mxu0 0
        %499 = vmatpush2.bf16.msra.mxu0 0
        %500 = vmatprep.mubr.bf16.mxu0 0
        %501 = vmatmul.mubr.bf16.gmra.mxu0 %v359
        %v502 = vpop.f32.mrf.mxu0
        %v503 = vadd.f32 %v381, %v502
        %v504 = vpop.f32.mrf.mxu0
        %v505 = vadd.f32 %v385, %v504
        %v506 = vpop.f32.mrf.mxu0
        %v507 = vpop.f32.mrf.mxu0
        %508 = vdwg.mxu0
        %v509 = vmax.f32 %v503, 0.0
        %v510 = vmax.f32 %v505, 0.0
        %v511 = vld [vmem:[#allocation3] sm:$0xff]
        %v512 = vpack.c.bf16 %v509, %v509
        %v513 = vpack.c.bf16 %v510, %v510
        %v514 = vld [vmem:[%s302] sm:$0xf]
        %v515 = vld [vmem:[%s302 + $0x4] sm:$0xf]
        %v516 = vld [vmem:[%s302 + $0x8] sm:$0xf]
        %v517 = vld [vmem:[%s302 + $0xc] sm:$0xf]
        %v518 = vld [vmem:[%s302 + $0x10] sm:$0xf]
        %v519 = vld [vmem:[%s302 + $0x14] sm:$0xf]
        %v520 = vld [vmem:[%s302 + $0x18] sm:$0xf]
        %v521 = vld [vmem:[%s302 + $0x1c] sm:$0xf]
        %v522 = vld [vmem:[%s302 + $0x20] sm:$0xf]
        %v523 = vld [vmem:[%s302 + $0x24] sm:$0xf]
        %v524 = vld [vmem:[%s302 + $0x28] sm:$0xf]
        %v525 = vld [vmem:[%s302 + $0x2c] sm:$0xf]
        %v526 = vld [vmem:[%s302 + $0x30] sm:$0xf]
        %v527 = vld [vmem:[%s302 + $0x34] sm:$0xf]
        %v528 = vld [vmem:[%s302 + $0x38] sm:$0xf]
        %v529 = vld [vmem:[%s302 + $0x3c] sm:$0xf]
        %v530 = vld [vmem:[%s302 + $0x40] sm:$0xf]
        %v531 = vld [vmem:[%s302 + $0x44] sm:$0xf]
        %v532 = vld [vmem:[%s302 + $0x48] sm:$0xf]
        %v533 = vld [vmem:[%s302 + $0x4c] sm:$0xf]
        %v534 = vld [vmem:[%s302 + $0x50] sm:$0xf]
        %v535 = vld [vmem:[%s302 + $0x54] sm:$0xf]
        %v536 = vld [vmem:[%s302 + $0x58] sm:$0xf]
        %v537 = vld [vmem:[%s302 + $0x5c] sm:$0xf]
        %v538 = vld [vmem:[%s302 + $0x60] sm:$0xf]
        %v539 = vld [vmem:[%s302 + $0x64] sm:$0xf]
        %v540 = vld [vmem:[%s302 + $0x68] sm:$0xf]
        %v541 = vld [vmem:[%s302 + $0x6c] sm:$0xf]
        %v542 = vld [vmem:[%s302 + $0x70] sm:$0xf]
        %v543 = vld [vmem:[%s302 + $0x74] sm:$0xf]
        %v544 = vld [vmem:[%s302 + $0x78] sm:$0xf]
        %v545 = vld [vmem:[%s302 + $0x7c] sm:$0xf]
        %v578 = vunpack.c.l.b16 %v514
        %v579 = vunpack.c.l.b16 %v515
        %v580 = vunpack.c.l.b16 %v516
        %v581 = vunpack.c.l.b16 %v517
        %v582 = vunpack.c.l.b16 %v518
        %v583 = vunpack.c.l.b16 %v519
        %v584 = vunpack.c.l.b16 %v520
        %v585 = vunpack.c.l.b16 %v521
        %v586 = vunpack.c.l.b16 %v522
        %v587 = vunpack.c.l.b16 %v523
        %v588 = vunpack.c.l.b16 %v524
        %v589 = vunpack.c.l.b16 %v525
        %v590 = vunpack.c.l.b16 %v526
        %v591 = vunpack.c.l.b16 %v527
        %v592 = vunpack.c.l.b16 %v528
        %v593 = vunpack.c.l.b16 %v529
        %v594 = vunpack.c.l.b16 %v530
        %v595 = vunpack.c.l.b16 %v531
        %v596 = vunpack.c.l.b16 %v532
        %v597 = vunpack.c.l.b16 %v533
        %v598 = vunpack.c.l.b16 %v534
        %v599 = vunpack.c.l.b16 %v535
        %v600 = vunpack.c.l.b16 %v536
        %v601 = vunpack.c.l.b16 %v537
        %v602 = vunpack.c.l.b16 %v538
        %v603 = vunpack.c.l.b16 %v539
        %v604 = vunpack.c.l.b16 %v540
        %v605 = vunpack.c.l.b16 %v541
        %v606 = vunpack.c.l.b16 %v542
        %v607 = vunpack.c.l.b16 %v543
        %v608 = vunpack.c.l.b16 %v544
        %v609 = vunpack.c.l.b16 %v545
        %v610 = vpack.c.b16 %v579, %v578
        %v611 = vpack.c.b16 %v581, %v580
        %v612 = vpack.c.b16 %v583, %v582
        %v613 = vpack.c.b16 %v585, %v584
        %v614 = vpack.c.b16 %v587, %v586
        %v615 = vpack.c.b16 %v589, %v588
        %v616 = vpack.c.b16 %v591, %v590
        %v617 = vpack.c.b16 %v593, %v592
        %v618 = vpack.c.b16 %v595, %v594
        %v619 = vpack.c.b16 %v597, %v596
        %v620 = vpack.c.b16 %v599, %v598
        %v621 = vpack.c.b16 %v601, %v600
        %v622 = vpack.c.b16 %v603, %v602
        %v623 = vpack.c.b16 %v605, %v604
        %v624 = vpack.c.b16 %v607, %v606
        %v625 = vpack.c.b16 %v609, %v608
        %642 = vmatprep.subr.bf16.mxu0 0
        %643 = vmatpush1.bf16.msra.mxu0 %v617
        %644 = vmatprep.subr.bf16.mxu0 0
        %645 = vmatpush1.bf16.msra.mxu0 %v616
        %646 = vmatprep.subr.bf16.mxu0 0
        %647 = vmatpush1.bf16.msra.mxu0 %v615
        %648 = vmatprep.subr.bf16.mxu0 0
        %649 = vmatpush1.bf16.msra.mxu0 %v614
        %650 = vmatprep.subr.bf16.mxu0 0
        %651 = vmatpush1.bf16.msra.mxu0 %v613
        %652 = vmatprep.subr.bf16.mxu0 0
        %653 = vmatpush1.bf16.msra.mxu0 %v612
        %654 = vmatprep.subr.bf16.mxu0 0
        %655 = vmatpush1.bf16.msra.mxu0 %v611
        %656 = vmatprep.subr.bf16.mxu0 0
        %657 = vmatpush1.bf16.msra.mxu0 %v610
        %658 = vmatprep.subr.bf16.mxu0 0
        %659 = vmatpush2.bf16.msra.mxu0 %v625
        %660 = vmatprep.subr.bf16.mxu0 0
        %661 = vmatpush2.bf16.msra.mxu0 %v624
        %662 = vmatprep.subr.bf16.mxu0 0
        %663 = vmatpush2.bf16.msra.mxu0 %v623
        %664 = vmatprep.subr.bf16.mxu0 0
        %665 = vmatpush2.bf16.msra.mxu0 %v622
        %666 = vmatprep.subr.bf16.mxu0 0
        %667 = vmatpush2.bf16.msra.mxu0 %v621
        %668 = vmatprep.subr.bf16.mxu0 0
        %669 = vmatpush2.bf16.msra.mxu0 %v620
        %670 = vmatprep.subr.bf16.mxu0 0
        %671 = vmatpush2.bf16.msra.mxu0 %v619
        %672 = vmatprep.subr.bf16.mxu0 0
        %673 = vmatpush2.bf16.msra.mxu0 %v618
        %674 = vmatprep.mubr.bf16.mxu0 %v513
        %675 = vmatmul.mubr.bf16.gmra.mxu0 %v512
        %v676 = vpop.f32.mrf.mxu0
        %v677 = vadd.f32 0.0, %v676
        %v678 = vpop.f32.mrf.mxu0
        %v679 = vpop.f32.mrf.mxu0
        %v680 = vpop.f32.mrf.mxu0
        %681 = vdwg.mxu0
        %v682 = vadd.f32 %v511, %v677
        %683 = vst [vmem:[#allocation3] sm:$0xff] %v682
        %p684 = scmp.eq.s32.totalorder %s30, 1
        // Predicated region
        $region57: #{positionwise_feed_forward.1} parent=39 // pred_check
          %p685 = pneg %p684
        $region58: #{positionwise_feed_forward.1} parent=39 // pred_check_branch
          %687 = sbr.rel (%p685) target = $region60
        $region59: #{positionwise_feed_forward.1} parent=39 // pred_region
          %v688 = vld [vmem:[#allocation3] sm:$0xff]
          %v689 = vld [vmem:[%s4] sm:$0x1]
          %v691 = vlaneseq
          %v692 = vshrl.u32 %v691, 7
          %v693 = vsub.s32 0, %v692
          %v694 = vrot.slane %v689, %v693
          %v696 = vadd.f32 %v688, %v694
          %697 = vst [vmem:[%s342] sm:$0xff] %v696
        $region60: #{positionwise_feed_forward.1} parent=39 // pred_fallthru
          _
        %s698 = sand.u32 %s170, 1
        %s699 = scalar_lea.sflag [#allocation6], %s698
        %s700 = sand.u32 %s170, 1
        %s701 = smul.addr %s700, 8
        %s702 = scalar_lea.vmem [#allocation10], %s701
        // Predicated region
        $region61: #{positionwise_feed_forward.1} parent=39 // pred_check
          %p703 = pneg %p180
        $region62: #{positionwise_feed_forward.1} parent=39 // pred_check_branch
          %705 = sbr.rel (%p703) target = $region64
        $region63: #{positionwise_feed_forward.1} parent=39 // pred_region
          %s707 = ssub.s32 128, 128
          %708 = vsyncadd %s699, %s707
          %s709 = smul.addr %s29, 128
          %s710 = scalar_lea.hbm %s5, %s709
          %s712 = sshll.u32 %s702, 4
          %s713 = int_to_ptr.vmem [resolvable:$true] %s712
          %715 = dma.vmem_to_hbm [thread:$0]  %s713, 128, %s710, %s699
        $region64: #{positionwise_feed_forward.1} parent=39 // pred_fallthru
          _
      $region40: #{positionwise_feed_forward.1} parent=5 // pred_fallthru
        _
      %p716 = scmp.le.s32.totalorder 2, %s20
      // Predicated region
      $region65: #{positionwise_feed_forward.1} parent=5 // pred_check
        %p717 = pneg %p716
      $region66: #{positionwise_feed_forward.1} parent=5 // pred_check_branch
        %719 = sbr.rel (%p717) target = $region68
      $region67: #{positionwise_feed_forward.1} parent=5 // pred_region
        %s720 = ssub.s32 %s20, 2
        // Predicated region
        $region69: #{positionwise_feed_forward.1} parent=67 // pred_check
          %p721 = pneg %p186
        $region70: #{positionwise_feed_forward.1} parent=67 // pred_check_branch
          %723 = sbr.rel (%p721) target = $region72
        $region71: #{positionwise_feed_forward.1} parent=67 // pred_region
          %s724 = sand.u32 %s171, 1
          %s725 = scalar_lea.sflag [#allocation6], %s724
          %s726 = sand.u32 %s171, 1
          %s727 = smul.addr %s726, 8
          %s728 = scalar_lea.vmem [#allocation10], %s727
          %729 = dma.done %s725, 128
        $region72: #{positionwise_feed_forward.1} parent=67 // pred_fallthru
          _
      $region68: #{positionwise_feed_forward.1} parent=5 // pred_fallthru
        _
    $region6: #{positionwise_feed_forward.1} parent=1 // loop_footer
      %s24 = sadd.s32 1, %s20
    $region7: #{positionwise_feed_forward.1} parent=1 // loop_footer_branch
      %19 = sbr.rel target = $region3
    $region8: #{positionwise_feed_forward.1} parent=1 // loop_exit
      _
    %730 = vsyncpa [#allocation5], 1
    %s731 = scalar_lea.sflag [#allocation5], 1
    %732 = vsyncpa %s731, 1
    %733 = vsyncpa [#allocation8], 1
    %s734 = scalar_lea.sflag [#allocation8], 1
    %735 = vsyncpa %s734, 1
    %736 = vsyncpa [#allocation6], 1
    %s737 = scalar_lea.sflag [#allocation6], 1
    %738 = vsyncpa %s737, 1

</llo_original>
